<compile_context>
chip_gen: v6e
topology: v6e:2x2x1
jax: 0.10.0
libtpu: 0.0.40
codegen_flags: <defaults>
</compile_context>

<pallas_src>
import math

import jax
import jax.numpy as jnp
from jax import lax
from jax.experimental import pallas as pl
from jax.experimental.pallas import tpu as pltpu


def _round_up(x, m):
    return ((x + m - 1) // m) * m


def _ffn_kernel(x_ref, w1a_ref, w1g_ref, b1a_ref, b1g_ref, w2_ref, b2_ref,
                o_ref, acc_ref):
    # x:   (TN, D)  bf16      w1a/w1g: (D, TH) bf16     b1a/b1g: (1, TH) f32
    # w2:  (TH, D)  bf16      b2:      (1, D)  f32
    # o:   (TN, D)  f32       acc:     (TN, D) f32 scratch (resident across H)
    j = pl.program_id(1)

    @pl.when(j == 0)
    def _():
        acc_ref[...] = jnp.zeros_like(acc_ref)

    x = x_ref[...]

    # First linear, split into value / gate halves (torch chunk(2, dim=-1)).
    a = jnp.dot(x, w1a_ref[...], preferred_element_type=jnp.float32) + b1a_ref[...]
    g = jnp.dot(x, w1g_ref[...], preferred_element_type=jnp.float32) + b1g_ref[...]

    # GEGLU with exact erf GELU (matches torch F.gelu default), computed in f32.
    gelu_g = 0.5 * g * (1.0 + lax.erf(g * (1.0 / math.sqrt(2.0))))
    y = (a * gelu_g).astype(jnp.bfloat16)

    # Second linear: accumulate partial (TN, D) products over the H grid axis.
    acc_ref[...] += jnp.dot(y, w2_ref[...], preferred_element_type=jnp.float32)

    @pl.when(j == pl.num_programs(1) - 1)
    def _():
        # Dropout(p=0.0) is the identity (eval semantics); nothing to do.
        o_ref[...] = (acc_ref[...] + b2_ref[...]).astype(o_ref.dtype)


def feedforward_pallas(x, w1, b1, w2, b2, *, tn=256, th=512):
    """x: (B, S, D) f32. w1: (D, 2H), b1: (2H,), w2: (H, D), b2: (D,).

    Weights are stored pre-transposed relative to torch (in_features first) so
    y = x @ W.T + b becomes y = x @ W + b.
    """
    B, S, D = x.shape
    N = B * S
    H = w1.shape[1] // 2

    # Tile sizes: clamp to the (aligned) problem size. 16-aligned token tiles
    # (bf16 sublane packing) and 128-aligned hidden tiles (lane width).
    TN = min(tn, _round_up(N, 16))
    TH = min(th, _round_up(H, 128))
    N_pad = _round_up(N, TN)
    H_pad = _round_up(H, TH)

    # Split w1/b1 into value and gate halves at the wrapper level.
    w1a, w1g = w1[:, :H], w1[:, H:]
    b1a, b1g = b1[:H], b1[H:]

    # Zero-pad the hidden axis: zero w1 columns + zero bias => a = g = 0
    # => gelu(0) = 0 => zero contribution through w2's zero rows.
    if H_pad != H:
        ph = H_pad - H
        w1a = jnp.pad(w1a, ((0, 0), (0, ph)))
        w1g = jnp.pad(w1g, ((0, 0), (0, ph)))
        b1a = jnp.pad(b1a, (0, ph))
        b1g = jnp.pad(b1g, (0, ph))
        w2 = jnp.pad(w2, ((0, ph), (0, 0)))

    x2d = x.reshape(N, D)
    if N_pad != N:
        x2d = jnp.pad(x2d, ((0, N_pad - N), (0, 0)))

    # bf16 MXU operands; biases stay f32.
    x_bf = x2d.astype(jnp.bfloat16)
    w1a_bf = w1a.astype(jnp.bfloat16)
    w1g_bf = w1g.astype(jnp.bfloat16)
    w2_bf = w2.astype(jnp.bfloat16)
    b1a_2d = b1a.reshape(1, H_pad).astype(jnp.float32)
    b1g_2d = b1g.reshape(1, H_pad).astype(jnp.float32)
    b2_2d = b2.reshape(1, D).astype(jnp.float32)

    grid = (N_pad // TN, H_pad // TH)

    # Advisory cost estimate: 2*N*D*(2H) + 2*N*H*D flops, one erf per hidden elem.
    cost = pl.CostEstimate(
        flops=6 * N * D * H,
        transcendentals=N * H,
        bytes_accessed=(x_bf.size * 2 + w1a_bf.size * 2 + w1g_bf.size * 2
                        + w2_bf.size * 2 + N_pad * D * 4),
    )

    out = pl.pallas_call(
        _ffn_kernel,
        out_shape=jax.ShapeDtypeStruct((N_pad, D), x.dtype),
        grid_spec=pltpu.PrefetchScalarGridSpec(
            num_scalar_prefetch=0,
            grid=grid,
            in_specs=[
                pl.BlockSpec((TN, D), lambda i, j: (i, 0)),   # x tile (per token tile)
                pl.BlockSpec((D, TH), lambda i, j: (0, j)),   # w1 value half tile
                pl.BlockSpec((D, TH), lambda i, j: (0, j)),   # w1 gate half tile
                pl.BlockSpec((1, TH), lambda i, j: (0, j)),   # b1 value half tile
                pl.BlockSpec((1, TH), lambda i, j: (0, j)),   # b1 gate half tile
                pl.BlockSpec((TH, D), lambda i, j: (j, 0)),   # w2 tile
                pl.BlockSpec((1, D), lambda i, j: (0, 0)),    # b2
            ],
            out_specs=pl.BlockSpec((TN, D), lambda i, j: (i, 0)),
            scratch_shapes=[pltpu.VMEM((TN, D), jnp.float32)],
        ),
        compiler_params=pltpu.CompilerParams(
            dimension_semantics=("parallel", "arbitrary")),
        cost_estimate=cost,
    )(x_bf, w1a_bf, w1g_bf, b1a_2d, b1g_2d, w2_bf, b2_2d)

    return out[:N].reshape(B, S, D)


def init_params(key, dim, mult=4, dtype=jnp.float32):
    """Deterministic init matching nn.Linear default bounds (uniform +-1/sqrt(fan_in))."""
    hidden = dim * mult
    k1, k2, k3, k4 = jax.random.split(key, 4)
    bound1 = 1.0 / math.sqrt(dim)
    bound2 = 1.0 / math.sqrt(hidden)
    # Stored transposed relative to torch: (in_features, out_features).
    w1 = jax.random.uniform(k1, (dim, hidden * 2), dtype, -bound1, bound1)
    b1 = jax.random.uniform(k2, (hidden * 2,), dtype, -bound1, bound1)
    w2 = jax.random.uniform(k3, (hidden, dim), dtype, -bound2, bound2)
    b2 = jax.random.uniform(k4, (dim,), dtype, -bound2, bound2)
    return w1, b1, w2, b2


def feedforward_ref(x, w1, b1, w2, b2):
    """Pure-JAX f32 reference for correctness check."""
    h = jnp.einsum("bsd,dh->bsh", x, w1) + b1
    hdim = h.shape[-1] // 2
    a, g = h[..., :hdim], h[..., hdim:]
    y = a * jax.nn.gelu(g, approximate=False)
    return jnp.einsum("bsh,hd->bsd", y, w2) + b2


if __name__ == "__main__":
    key = jax.random.PRNGKey(0)
    kx, kp = jax.random.split(key)

    batch, seq, dim, mult = 2, 8, 32, 4
    x = jax.random.normal(kx, (batch, seq, dim), jnp.float32)
    w1, b1, w2, b2 = init_params(kp, dim, mult)

    out = feedforward_pallas(x, w1, b1, w2, b2)
    out = jax.block_until_ready(out)

    ref = feedforward_ref(x, w1, b1, w2, b2)
    assert out.shape == (batch, seq, dim)
    # bf16 MXU operands (f32 accumulation) => loosened tolerance vs f32 reference.
    assert jnp.allclose(out, ref, atol=3e-2, rtol=3e-2), "mismatch vs reference"

    print("KERNEL_OK")
</pallas_src>

<mosaic_0001>
module attributes {stable_mosaic.version = 11 : i64} {
  func.func @_ffn_kernel(%arg0: i32, %arg1: i32, %arg2: memref<16x32xbf16, #tpu.memory_space<vmem>>, %arg3: memref<32x128xbf16, #tpu.memory_space<vmem>>, %arg4: memref<32x128xbf16, #tpu.memory_space<vmem>>, %arg5: memref<1x128xf32, #tpu.memory_space<vmem>>, %arg6: memref<1x128xf32, #tpu.memory_space<vmem>>, %arg7: memref<128x32xbf16, #tpu.memory_space<vmem>>, %arg8: memref<1x32xf32, #tpu.memory_space<vmem>>, %arg9: memref<16x32xf32, #tpu.memory_space<vmem>>, %arg10: memref<16x32xf32, #tpu.memory_space<vmem>>) attributes {dimension_semantics = [#tpu.dimension_semantics<parallel>, #tpu.dimension_semantics<arbitrary>], iteration_bounds = array<i64: 1, 1>, scalar_prefetch = 0 : i64, scratch_operands = 1 : i64, tpu.core_type = #tpu.core_type<tc>, window_params = [{transform_indices = @transform_0, window_bounds = array<i64: 16, 32>}, {transform_indices = @transform_1, window_bounds = array<i64: 32, 128>}, {transform_indices = @transform_2, window_bounds = array<i64: 32, 128>}, {transform_indices = @transform_3, window_bounds = array<i64: 1, 128>}, {transform_indices = @transform_4, window_bounds = array<i64: 1, 128>}, {transform_indices = @transform_5, window_bounds = array<i64: 128, 32>}, {pipeline_mode = #tpu.pipeline_mode<synchronous>, transform_indices = @transform_6, window_bounds = array<i64: 1, 32>}, {transform_indices = @transform_7, window_bounds = array<i64: 16, 32>}]} {
    %c0_i32 = arith.constant 0 : i32
    %0 = arith.cmpi eq, %arg1, %c0_i32 : i32
    %1 = arith.extui %0 : i1 to i32
    %c0_i32_0 = arith.constant 0 : i32
    %2 = arith.cmpi ne, %1, %c0_i32_0 : i32
    scf.if %2 {
      %cst_23 = arith.constant 0.000000e+00 : f32
      %32 = vector.broadcast %cst_23 : f32 to vector<16x32xf32>
      %c0_24 = arith.constant 0 : index
      %c0_25 = arith.constant 0 : index
      %33 = vector.load %arg10[%c0_24, %c0_25] : memref<16x32xf32, #tpu.memory_space<vmem>>, vector<16x32xf32>
      tpu.vector_store %arg10[%c0_24, %c0_25], %32 {strides = array<i32>} : memref<16x32xf32, #tpu.memory_space<vmem>>, vector<16x32xf32>,
    } else {
    }
    %c0 = arith.constant 0 : index
    %c0_1 = arith.constant 0 : index
    %3 = vector.load %arg2[%c0, %c0_1] : memref<16x32xbf16, #tpu.memory_space<vmem>>, vector<16x32xbf16>
    %c0_2 = arith.constant 0 : index
    %c0_3 = arith.constant 0 : index
    %4 = vector.load %arg3[%c0_2, %c0_3] : memref<32x128xbf16, #tpu.memory_space<vmem>>, vector<32x128xbf16>
    %cst = arith.constant dense<0.000000e+00> : vector<16x128xf32>
    %5 = tpu.matmul %3, %4, %cst {dimension_numbers = #tpu.dot_dimension_numbers<[1], [0], [0], [1], [0, 0, 1, 1], [], []>} : vector<16x32xbf16>, vector<32x128xbf16>, vector<16x128xf32> -> vector<16x128xf32>
    %c0_4 = arith.constant 0 : index
    %c0_5 = arith.constant 0 : index
    %6 = vector.load %arg5[%c0_4, %c0_5] : memref<1x128xf32, #tpu.memory_space<vmem>>, vector<1x128xf32>
    %7 = vector.broadcast %6 : vector<1x128xf32> to vector<16x128xf32>
    %8 = arith.addf %5, %7 : vector<16x128xf32>
    %c0_6 = arith.constant 0 : index
    %c0_7 = arith.constant 0 : index
    %9 = vector.load %arg4[%c0_6, %c0_7] : memref<32x128xbf16, #tpu.memory_space<vmem>>, vector<32x128xbf16>
    %cst_8 = arith.constant dense<0.000000e+00> : vector<16x128xf32>
    %10 = tpu.matmul %3, %9, %cst_8 {dimension_numbers = #tpu.dot_dimension_numbers<[1], [0], [0], [1], [0, 0, 1, 1], [], []>} : vector<16x32xbf16>, vector<32x128xbf16>, vector<16x128xf32> -> vector<16x128xf32>
    %c0_9 = arith.constant 0 : index
    %c0_10 = arith.constant 0 : index
    %11 = vector.load %arg6[%c0_9, %c0_10] : memref<1x128xf32, #tpu.memory_space<vmem>>, vector<1x128xf32>
    %12 = vector.broadcast %11 : vector<1x128xf32> to vector<16x128xf32>
    %13 = arith.addf %10, %12 : vector<16x128xf32>
    %cst_11 = arith.constant 5.000000e-01 : f32
    %14 = vector.broadcast %cst_11 : f32 to vector<16x128xf32>
    %15 = arith.mulf %14, %13 : vector<16x128xf32>
    %cst_12 = arith.constant 0.707106769 : f32
    %16 = vector.broadcast %cst_12 : f32 to vector<16x128xf32>
    %17 = arith.mulf %13, %16 : vector<16x128xf32>
    %18 = math.erf %17 : vector<16x128xf32>
    %cst_13 = arith.constant 1.000000e+00 : f32
    %19 = vector.broadcast %cst_13 : f32 to vector<16x128xf32>
    %20 = arith.addf %19, %18 : vector<16x128xf32>
    %21 = arith.mulf %15, %20 : vector<16x128xf32>
    %22 = arith.mulf %8, %21 : vector<16x128xf32>
    %23 = arith.truncf %22 : vector<16x128xf32> to vector<16x128xbf16>
    %c0_14 = arith.constant 0 : index
    %c0_15 = arith.constant 0 : index
    %24 = vector.load %arg10[%c0_14, %c0_15] : memref<16x32xf32, #tpu.memory_space<vmem>>, vector<16x32xf32>
    %c0_16 = arith.constant 0 : index
    %c0_17 = arith.constant 0 : index
    %25 = vector.load %arg7[%c0_16, %c0_17] : memref<128x32xbf16, #tpu.memory_space<vmem>>, vector<128x32xbf16>
    %cst_18 = arith.constant dense<0.000000e+00> : vector<16x32xf32>
    %26 = tpu.matmul %23, %25, %cst_18 {dimension_numbers = #tpu.dot_dimension_numbers<[1], [0], [0], [1], [0, 0, 1, 1], [], []>} : vector<16x128xbf16>, vector<128x32xbf16>, vector<16x32xf32> -> vector<16x32xf32>
    %27 = arith.addf %24, %26 : vector<16x32xf32>
    %c0_19 = arith.constant 0 : index
    %c0_20 = arith.constant 0 : index
    %28 = vector.load %arg10[%c0_19, %c0_20] : memref<16x32xf32, #tpu.memory_space<vmem>>, vector<16x32xf32>
    tpu.vector_store %arg10[%c0_19, %c0_20], %27 {strides = array<i32>} : memref<16x32xf32, #tpu.memory_space<vmem>>, vector<16x32xf32>,
    %c0_i32_21 = arith.constant 0 : i32
    %29 = arith.cmpi eq, %arg1, %c0_i32_21 : i32
    %30 = arith.extui %29 : i1 to i32
    %c0_i32_22 = arith.constant 0 : i32
    %31 = arith.cmpi ne, %30, %c0_i32_22 : i32
    scf.if %31 {
      %c0_23 = arith.constant 0 : index
      %c0_24 = arith.constant 0 : index
      %32 = vector.load %arg10[%c0_23, %c0_24] : memref<16x32xf32, #tpu.memory_space<vmem>>, vector<16x32xf32>
      %c0_25 = arith.constant 0 : index
      %c0_26 = arith.constant 0 : index
      %33 = vector.load %arg8[%c0_25, %c0_26] : memref<1x32xf32, #tpu.memory_space<vmem>>, vector<1x32xf32>
      %34 = vector.broadcast %33 : vector<1x32xf32> to vector<16x32xf32>
      %35 = arith.addf %32, %34 : vector<16x32xf32>
      %c0_27 = arith.constant 0 : index
      %c0_28 = arith.constant 0 : index
      %36 = vector.load %arg9[%c0_27, %c0_28] : memref<16x32xf32, #tpu.memory_space<vmem>>, vector<16x32xf32>
      tpu.vector_store %arg9[%c0_27, %c0_28], %35 {strides = array<i32>} : memref<16x32xf32, #tpu.memory_space<vmem>>, vector<16x32xf32>,
    } else {
    }
    return
  }
  func.func @transform_0(%arg0: i32, %arg1: i32) -> (i32, i32) {
    %c0_i32 = arith.constant 0 : i32
    %c0_i32_0 = arith.constant 0 : i32
    return %arg0, %c0_i32 : i32, i32
  }
  func.func @transform_1(%arg0: i32, %arg1: i32) -> (i32, i32) {
    %c0_i32 = arith.constant 0 : i32
    %c0_i32_0 = arith.constant 0 : i32
    return %c0_i32, %arg1 : i32, i32
  }
  func.func @transform_2(%arg0: i32, %arg1: i32) -> (i32, i32) {
    %c0_i32 = arith.constant 0 : i32
    %c0_i32_0 = arith.constant 0 : i32
    return %c0_i32, %arg1 : i32, i32
  }
  func.func @transform_3(%arg0: i32, %arg1: i32) -> (i32, i32) {
    %c0_i32 = arith.constant 0 : i32
    %c0_i32_0 = arith.constant 0 : i32
    return %c0_i32, %arg1 : i32, i32
  }
  func.func @transform_4(%arg0: i32, %arg1: i32) -> (i32, i32) {
    %c0_i32 = arith.constant 0 : i32
    %c0_i32_0 = arith.constant 0 : i32
    return %c0_i32, %arg1 : i32, i32
  }
  func.func @transform_5(%arg0: i32, %arg1: i32) -> (i32, i32) {
    %c0_i32 = arith.constant 0 : i32
    %c0_i32_0 = arith.constant 0 : i32
    return %arg1, %c0_i32 : i32, i32
  }
  func.func @transform_6(%arg0: i32, %arg1: i32) -> (i32, i32) {
    %c0_i32 = arith.constant 0 : i32
    %c0_i32_0 = arith.constant 0 : i32
    %c0_i32_1 = arith.constant 0 : i32
    return %c0_i32, %c0_i32_0 : i32, i32
  }
  func.func @transform_7(%arg0: i32, %arg1: i32) -> (i32, i32) {
    %c0_i32 = arith.constant 0 : i32
    %c0_i32_0 = arith.constant 0 : i32
    return %arg0, %c0_i32 : i32, i32
  }
}

</mosaic_0001>

<llo_original>
// kernel: tpu_custom_call.1
$region0: #{tpu_custom_call.1}
  #allocation0 [shape = 'u32[]', space=smem, size = 0x4, offset = 0x4, fixed_abs, tag = 'smem constant byte address 0x4 - core index']
  #allocation1 [shape = 'u32[144,128]{1,0:T(1,128)}', space=vmem, size = 0x12000, scoped, tag = 'internal scratch']
  #allocation2 [shape = 'f32[16,32]{1,0:T(8,128)}', space=vmem, size = 0x2000, scoped, tag = 'scratch operand']
  %s0 = inlined_call_operand.vmem [shape: bf16[16,32], index: 0, kind: input, shape index: {}]
  %s1 = inlined_call_operand.vmem [shape: bf16[32,128], index: 1, kind: input, shape index: {}]
  %s2 = inlined_call_operand.vmem [shape: bf16[32,128], index: 2, kind: input, shape index: {}]
  %s3 = inlined_call_operand.vmem [shape: f32[1,128], index: 3, kind: input, shape index: {}]
  %s4 = inlined_call_operand.vmem [shape: f32[1,128], index: 4, kind: input, shape index: {}]
  %s5 = inlined_call_operand.vmem [shape: bf16[128,32], index: 5, kind: input, shape index: {}]
  %s6 = inlined_call_operand.vmem [shape: f32[1,32], index: 6, kind: input, shape index: {}]
  %s7 = inlined_call_operand.hbm [shape: f32[16,32], index: 7, kind: output, shape index: {}]
  %s8 = sld [smem:[#allocation0]]
  $region46: #{tpu_custom_call.1} parent=0
    _
  %s10 = ssub.s32 1, %s8
  %s11 = scalar_select 0, %s10, %s8
  $region1: #{tpu_custom_call.1} parent=0
    #allocation3 [shape = 'u8[8192]{0}', space=vmem, size = 0x2000, scoped, tag = 'output window, operand 0, single buffered']
    #allocation4 [shape = 's32[1]{0}', space=sflag, size = 0x4, scoped, tag = 'scoped memory for tpu_custom_call.1']
    %12 = vsyncpa [#allocation4], 0
    // Predicated region
    $region2: #{tpu_custom_call.1} parent=1 // pred_check
      _
    $region3: #{tpu_custom_call.1} parent=1 // pred_check_branch
      %14 = sbr.rel (0) target = $region5
    $region4: #{tpu_custom_call.1} parent=1 // pred_region
      _
    $region5: #{tpu_custom_call.1} parent=1 // pred_fallthru
      _
    // Predicated region
    $region6: #{tpu_custom_call.1} parent=1 // pred_check
      _
    $region7: #{tpu_custom_call.1} parent=1 // pred_check_branch
      %16 = sbr.rel (0) target = $region9
    $region8: #{tpu_custom_call.1} parent=1 // pred_region
      _
    $region9: #{tpu_custom_call.1} parent=1 // pred_fallthru
      _
    // Predicated region
    $region10: #{tpu_custom_call.1} parent=1 // pred_check
      _
    $region11: #{tpu_custom_call.1} parent=1 // pred_check_branch
      %18 = sbr.rel (0) target = $region13
    $region12: #{tpu_custom_call.1} parent=1 // pred_region
      _
    $region13: #{tpu_custom_call.1} parent=1 // pred_fallthru
      _
    // Predicated region
    $region14: #{tpu_custom_call.1} parent=1 // pred_check
      _
    $region15: #{tpu_custom_call.1} parent=1 // pred_check_branch
      %20 = sbr.rel (0) target = $region17
    $region16: #{tpu_custom_call.1} parent=1 // pred_region
      _
    $region17: #{tpu_custom_call.1} parent=1 // pred_fallthru
      _
    // Predicated region
    $region18: #{tpu_custom_call.1} parent=1 // pred_check
      _
    $region19: #{tpu_custom_call.1} parent=1 // pred_check_branch
      %22 = sbr.rel (0) target = $region21
    $region20: #{tpu_custom_call.1} parent=1 // pred_region
      _
    $region21: #{tpu_custom_call.1} parent=1 // pred_fallthru
      _
    // Predicated region
    $region22: #{tpu_custom_call.1} parent=1 // pred_check
      _
    $region23: #{tpu_custom_call.1} parent=1 // pred_check_branch
      %24 = sbr.rel (0) target = $region25
    $region24: #{tpu_custom_call.1} parent=1 // pred_region
      _
    $region25: #{tpu_custom_call.1} parent=1 // pred_fallthru
      _
    // Predicated region
    $region26: #{tpu_custom_call.1} parent=1 // pred_check
      _
    $region27: #{tpu_custom_call.1} parent=1 // pred_check_branch
      %26 = sbr.rel (0) target = $region29
    $region28: #{tpu_custom_call.1} parent=1 // pred_region
      _
    $region29: #{tpu_custom_call.1} parent=1 // pred_fallthru
      _
    %p28 = scmp.eq.s32.totalorder 0, 0
    // Predicated region
    $region30: #{tpu_custom_call.1} parent=1 // pred_check
      %p29 = pneg %p28
    $region31: #{tpu_custom_call.1} parent=1 // pred_check_branch
      %31 = sbr.rel (%p29) target = $region33
    $region32: #{tpu_custom_call.1} parent=1 // pred_region
      %vm32 = vcmask 261120
      %33 = vst.msk [vmem:[#allocation2] sm:$0xff] %vm32, 0.0
      %34 = vst.msk [vmem:[#allocation2 + $0x8] sm:$0xff] %vm32, 0.0
    $region33: #{tpu_custom_call.1} parent=1 // pred_fallthru
      _
    %v35 = vld [vmem:[%s0] sm:$0xf]
    %v36 = vld [vmem:[%s0 + $0x4] sm:$0xf]
    %v37 = vld [vmem:[%s1] sm:$0xf]
    %v38 = vld [vmem:[%s1 + $0x4] sm:$0xf]
    %v39 = vld [vmem:[%s1 + $0x8] sm:$0xf]
    %v40 = vld [vmem:[%s1 + $0xc] sm:$0xf]
    %v41 = vld [vmem:[%s3] sm:$0x1]
    %v43 = vlaneseq
    %v44 = vshrl.u32 %v43, 7
    %v45 = vsub.s32 0, %v44
    %v46 = vrot.slane %v41, %v45
    %v50 = vunpack.c.l.b16 %v35
    %v51 = vunpack.c.l.b16 %v36
    %v52 = vpack.c.b16 %v51, %v50
    %v57 = vunpack.c.l.b16 %v37
    %v58 = vunpack.c.l.b16 %v38
    %v59 = vunpack.c.l.b16 %v39
    %v60 = vunpack.c.l.b16 %v40
    %v61 = vpack.c.b16 %v58, %v57
    %v62 = vpack.c.b16 %v60, %v59
    %vm65 = vcmask 261120
    %v67 = vsel %vm65, %v52, 0
    %69 = vmatprep.subr.bf16.mxu0 0
    %70 = vmatpush1.bf16.msra.mxu0 0
    %71 = vmatprep.subr.bf16.mxu0 0
    %72 = vmatpush1.bf16.msra.mxu0 0
    %73 = vmatprep.subr.bf16.mxu0 0
    %74 = vmatpush1.bf16.msra.mxu0 0
    %75 = vmatprep.subr.bf16.mxu0 0
    %76 = vmatpush1.bf16.msra.mxu0 0
    %77 = vmatprep.subr.bf16.mxu0 0
    %78 = vmatpush1.bf16.msra.mxu0 0
    %79 = vmatprep.subr.bf16.mxu0 0
    %80 = vmatpush1.bf16.msra.mxu0 0
    %81 = vmatprep.subr.bf16.mxu0 0
    %82 = vmatpush1.bf16.msra.mxu0 %v62
    %83 = vmatprep.subr.bf16.mxu0 0
    %84 = vmatpush1.bf16.msra.mxu0 %v61
    %85 = vmatprep.subr.bf16.mxu0 0
    %86 = vmatpush2.bf16.msra.mxu0 0
    %87 = vmatprep.subr.bf16.mxu0 0
    %88 = vmatpush2.bf16.msra.mxu0 0
    %89 = vmatprep.subr.bf16.mxu0 0
    %90 = vmatpush2.bf16.msra.mxu0 0
    %91 = vmatprep.subr.bf16.mxu0 0
    %92 = vmatpush2.bf16.msra.mxu0 0
    %93 = vmatprep.subr.bf16.mxu0 0
    %94 = vmatpush2.bf16.msra.mxu0 0
    %95 = vmatprep.subr.bf16.mxu0 0
    %96 = vmatpush2.bf16.msra.mxu0 0
    %97 = vmatprep.subr.bf16.mxu0 0
    %98 = vmatpush2.bf16.msra.mxu0 0
    %99 = vmatprep.subr.bf16.mxu0 0
    %100 = vmatpush2.bf16.msra.mxu0 0
    %101 = vmatprep.mubr.bf16.mxu0 0
    %102 = vmatmul.mubr.bf16.gmra.mxu0 %v67
    %v103 = vpop.f32.mrf.mxu0
    %v104 = vadd.f32 %v46, %v103
    %v105 = vpop.f32.mrf.mxu0
    %v106 = vpop.f32.mrf.mxu0
    %v107 = vadd.f32 %v46, %v106
    %v108 = vpop.f32.mrf.mxu0
    %109 = vdwg.mxu0
    %v110 = vld [vmem:[%s2] sm:$0xf]
    %v111 = vld [vmem:[%s2 + $0x4] sm:$0xf]
    %v112 = vld [vmem:[%s2 + $0x8] sm:$0xf]
    %v113 = vld [vmem:[%s2 + $0xc] sm:$0xf]
    %v114 = vld [vmem:[%s4] sm:$0x1]
    %v116 = vlaneseq
    %v117 = vshrl.u32 %v116, 7
    %v118 = vsub.s32 0, %v117
    %v119 = vrot.slane %v114, %v118
    %v125 = vunpack.c.l.b16 %v110
    %v126 = vunpack.c.l.b16 %v111
    %v127 = vunpack.c.l.b16 %v112
    %v128 = vunpack.c.l.b16 %v113
    %v129 = vpack.c.b16 %v126, %v125
    %v130 = vpack.c.b16 %v128, %v127
    %133 = vmatprep.subr.bf16.mxu0 0
    %134 = vmatpush1.bf16.msra.mxu0 0
    %135 = vmatprep.subr.bf16.mxu0 0
    %136 = vmatpush1.bf16.msra.mxu0 0
    %137 = vmatprep.subr.bf16.mxu0 0
    %138 = vmatpush1.bf16.msra.mxu0 0
    %139 = vmatprep.subr.bf16.mxu0 0
    %140 = vmatpush1.bf16.msra.mxu0 0
    %141 = vmatprep.subr.bf16.mxu0 0
    %142 = vmatpush1.bf16.msra.mxu0 0
    %143 = vmatprep.subr.bf16.mxu0 0
    %144 = vmatpush1.bf16.msra.mxu0 0
    %145 = vmatprep.subr.bf16.mxu0 0
    %146 = vmatpush1.bf16.msra.mxu0 %v130
    %147 = vmatprep.subr.bf16.mxu0 0
    %148 = vmatpush1.bf16.msra.mxu0 %v129
    %149 = vmatprep.subr.bf16.mxu0 0
    %150 = vmatpush2.bf16.msra.mxu0 0
    %151 = vmatprep.subr.bf16.mxu0 0
    %152 = vmatpush2.bf16.msra.mxu0 0
    %153 = vmatprep.subr.bf16.mxu0 0
    %154 = vmatpush2.bf16.msra.mxu0 0
    %155 = vmatprep.subr.bf16.mxu0 0
    %156 = vmatpush2.bf16.msra.mxu0 0
    %157 = vmatprep.subr.bf16.mxu0 0
    %158 = vmatpush2.bf16.msra.mxu0 0
    %159 = vmatprep.subr.bf16.mxu0 0
    %160 = vmatpush2.bf16.msra.mxu0 0
    %161 = vmatprep.subr.bf16.mxu0 0
    %162 = vmatpush2.bf16.msra.mxu0 0
    %163 = vmatprep.subr.bf16.mxu0 0
    %164 = vmatpush2.bf16.msra.mxu0 0
    %165 = vmatprep.mubr.bf16.mxu0 0
    %166 = vmatmul.mubr.bf16.gmra.mxu0 %v67
    %v167 = vpop.f32.mrf.mxu0
    %v168 = vadd.f32 %v119, %v167
    %v169 = vpop.f32.mrf.mxu0
    %v170 = vpop.f32.mrf.mxu0
    %v171 = vadd.f32 %v119, %v170
    %v172 = vpop.f32.mrf.mxu0
    %173 = vdwg.mxu0
    %v174 = vmul.f32 %v168, 0.5
    %v175 = vmul.f32 %v171, 0.5
    %v176 = vmul.f32 %v168, 0.70710677
    %v177 = vmul.f32 %v171, 0.70710677
    %v178 = verf.f32.pop %v176
    %v179 = verf.f32.pop %v177
    %v180 = vadd.f32 %v178, 1.0
    %v181 = vadd.f32 %v179, 1.0
    %v182 = vmul.f32 %v174, %v180
    %v183 = vmul.f32 %v175, %v181
    %v184 = vmul.f32 %v104, %v182
    %v185 = vmul.f32 %v107, %v183
    %v186 = vpack.c.bf16 %v185, %v184
    %v187 = vld [vmem:[#allocation2] sm:$0xff]
    %v188 = vld [vmem:[#allocation2 + $0x8] sm:$0xff]
    %v189 = vld [vmem:[%s5] sm:$0xf]
    %v190 = vld [vmem:[%s5 + $0x4] sm:$0xf]
    %v191 = vld [vmem:[%s5 + $0x8] sm:$0xf]
    %v192 = vld [vmem:[%s5 + $0xc] sm:$0xf]
    %v193 = vld [vmem:[%s5 + $0x10] sm:$0xf]
    %v194 = vld [vmem:[%s5 + $0x14] sm:$0xf]
    %v195 = vld [vmem:[%s5 + $0x18] sm:$0xf]
    %v196 = vld [vmem:[%s5 + $0x1c] sm:$0xf]
    %v197 = vld [vmem:[%s5 + $0x20] sm:$0xf]
    %v198 = vld [vmem:[%s5 + $0x24] sm:$0xf]
    %v199 = vld [vmem:[%s5 + $0x28] sm:$0xf]
    %v200 = vld [vmem:[%s5 + $0x2c] sm:$0xf]
    %v201 = vld [vmem:[%s5 + $0x30] sm:$0xf]
    %v202 = vld [vmem:[%s5 + $0x34] sm:$0xf]
    %v203 = vld [vmem:[%s5 + $0x38] sm:$0xf]
    %v204 = vld [vmem:[%s5 + $0x3c] sm:$0xf]
    %v221 = vunpack.c.l.b16 %v189
    %v222 = vunpack.c.l.b16 %v190
    %v223 = vunpack.c.l.b16 %v191
    %v224 = vunpack.c.l.b16 %v192
    %v225 = vunpack.c.l.b16 %v193
    %v226 = vunpack.c.l.b16 %v194
    %v227 = vunpack.c.l.b16 %v195
    %v228 = vunpack.c.l.b16 %v196
    %v229 = vunpack.c.l.b16 %v197
    %v230 = vunpack.c.l.b16 %v198
    %v231 = vunpack.c.l.b16 %v199
    %v232 = vunpack.c.l.b16 %v200
    %v233 = vunpack.c.l.b16 %v201
    %v234 = vunpack.c.l.b16 %v202
    %v235 = vunpack.c.l.b16 %v203
    %v236 = vunpack.c.l.b16 %v204
    %v237 = vpack.c.b16 %v222, %v221
    %v238 = vpack.c.b16 %v224, %v223
    %v239 = vpack.c.b16 %v226, %v225
    %v240 = vpack.c.b16 %v228, %v227
    %v241 = vpack.c.b16 %v230, %v229
    %v242 = vpack.c.b16 %v232, %v231
    %v243 = vpack.c.b16 %v234, %v233
    %v244 = vpack.c.b16 %v236, %v235
    %253 = vmatprep.subr.bf16.mxu0 0
    %254 = vmatpush1.bf16.msra.mxu0 %v244
    %255 = vmatprep.subr.bf16.mxu0 0
    %256 = vmatpush1.bf16.msra.mxu0 %v243
    %257 = vmatprep.subr.bf16.mxu0 0
    %258 = vmatpush1.bf16.msra.mxu0 %v242
    %259 = vmatprep.subr.bf16.mxu0 0
    %260 = vmatpush1.bf16.msra.mxu0 %v241
    %261 = vmatprep.subr.bf16.mxu0 0
    %262 = vmatpush1.bf16.msra.mxu0 %v240
    %263 = vmatprep.subr.bf16.mxu0 0
    %264 = vmatpush1.bf16.msra.mxu0 %v239
    %265 = vmatprep.subr.bf16.mxu0 0
    %266 = vmatpush1.bf16.msra.mxu0 %v238
    %267 = vmatprep.subr.bf16.mxu0 0
    %268 = vmatpush1.bf16.msra.mxu0 %v237
    %269 = vmatprep.subr.bf16.mxu0 0
    %270 = vmatpush2.bf16.msra.mxu0 0
    %271 = vmatprep.subr.bf16.mxu0 0
    %272 = vmatpush2.bf16.msra.mxu0 0
    %273 = vmatprep.subr.bf16.mxu0 0
    %274 = vmatpush2.bf16.msra.mxu0 0
    %275 = vmatprep.subr.bf16.mxu0 0
    %276 = vmatpush2.bf16.msra.mxu0 0
    %277 = vmatprep.subr.bf16.mxu0 0
    %278 = vmatpush2.bf16.msra.mxu0 0
    %279 = vmatprep.subr.bf16.mxu0 0
    %280 = vmatpush2.bf16.msra.mxu0 0
    %281 = vmatprep.subr.bf16.mxu0 0
    %282 = vmatpush2.bf16.msra.mxu0 0
    %283 = vmatprep.subr.bf16.mxu0 0
    %284 = vmatpush2.bf16.msra.mxu0 0
    %285 = vmatprep.mubr.bf16.mxu0 0
    %286 = vmatmul.mubr.bf16.gmra.mxu0 %v186
    %v287 = vpop.f32.mrf.mxu0
    %v288 = vadd.f32 0.0, %v287
    %v289 = vpop.f32.mrf.mxu0
    %v290 = vpop.f32.mrf.mxu0
    %v291 = vadd.f32 0.0, %v290
    %v292 = vpop.f32.mrf.mxu0
    %293 = vdwg.mxu0
    %v294 = vadd.f32 %v187, %v288
    %v295 = vadd.f32 %v188, %v291
    %296 = vst.msk [vmem:[#allocation2] sm:$0xff] %vm65, %v294
    %297 = vst.msk [vmem:[#allocation2 + $0x8] sm:$0xff] %vm65, %v295
    // Predicated region
    $region34: #{tpu_custom_call.1} parent=1 // pred_check
      %p298 = pneg %p28
    $region35: #{tpu_custom_call.1} parent=1 // pred_check_branch
      %300 = sbr.rel (%p298) target = $region37
    $region36: #{tpu_custom_call.1} parent=1 // pred_region
      %v301 = vld [vmem:[#allocation2] sm:$0xff]
      %v302 = vld [vmem:[#allocation2 + $0x8] sm:$0xff]
      %v303 = vld [vmem:[%s6] sm:$0x1]
      %v305 = vlaneseq
      %v306 = vshrl.u32 %v305, 7
      %v307 = vsub.s32 0, %v306
      %v308 = vrot.slane %v303, %v307
      %v310 = vadd.f32 %v301, %v308
      %v311 = vadd.f32 %v302, %v308
      %312 = vst.msk [vmem:[#allocation3] sm:$0xff] %vm65, %v310
      %313 = vst.msk [vmem:[#allocation3 + $0x8] sm:$0xff] %vm65, %v311
    $region37: #{tpu_custom_call.1} parent=1 // pred_fallthru
      _
    // Predicated region
    $region38: #{tpu_custom_call.1} parent=1 // pred_check
      _
    $region39: #{tpu_custom_call.1} parent=1 // pred_check_branch
      %315 = sbr.rel (0) target = $region41
    $region40: #{tpu_custom_call.1} parent=1 // pred_region
      %s317 = ssub.s32 256, 256
      %318 = vsyncadd [#allocation4], %s317
      %s319 = sshll.u32 [#allocation3], 4
      %s320 = int_to_ptr.vmem [resolvable:$true] %s319
      %325 = dma.vmem_to_hbm [thread:$0]  %s320, 256, %s7, [#allocation4], 128, 128, 8
    $region41: #{tpu_custom_call.1} parent=1 // pred_fallthru
      _
    // Predicated region
    $region42: #{tpu_custom_call.1} parent=1 // pred_check
      _
    $region43: #{tpu_custom_call.1} parent=1 // pred_check_branch
      %327 = sbr.rel (0) target = $region45
    $region44: #{tpu_custom_call.1} parent=1 // pred_region
      %328 = dma.done [#allocation4], 256
    $region45: #{tpu_custom_call.1} parent=1 // pred_fallthru
      _
    %329 = vsyncpa [#allocation4], 1

</llo_original>
